<compile_context>
chip_gen: v6e
topology: v6e:2x2x1
jax: 0.10.0
libtpu: 0.0.40
codegen_flags: <defaults>
</compile_context>

<pallas_src>
import jax
import jax.numpy as jnp
from jax.experimental import pallas as pl
from jax.experimental.pallas import tpu as pltpu


def _linear_kernel(w_ref, b_ref, x_ref, o_ref):
    # w_ref: (3,) SMEM, b_ref: (1,) SMEM
    # x_ref: (3, TILE) VMEM   (features on sublanes, batch on lanes)
    # o_ref: (1, TILE) VMEM
    x0 = x_ref[0:1, :]          # (1, TILE)
    x1 = x_ref[1:2, :]
    x2 = x_ref[2:3, :]
    out = w_ref[0] * x0 + w_ref[1] * x1 + w_ref[2] * x2 + b_ref[0]
    o_ref[...] = out.astype(o_ref.dtype)


def my_regression_forward(x, weight, bias, *, tile=32768):
    """x: (N, 3) f32, weight: (1, 3) f32, bias: (1, 1) f32 -> (N, 1) f32."""
    n = x.shape[0]

    # Lane-align: pad N up to a multiple of 128, pick a tile (multiple of 128),
    # then pad N up to a multiple of the tile so every block is full/unmasked.
    n_lane = pl.cdiv(n, 128) * 128
    tile = min(tile, n_lane)                 # both are multiples of 128
    n_pad = pl.cdiv(n_lane, tile) * tile

    # (N, 3) -> (3, N_pad): batch on lanes, padded batch entries are zeros
    # (their outputs are sliced away below).
    x_t = jnp.transpose(x)                   # (3, N)
    if n_pad != n:
        x_t = jnp.pad(x_t, ((0, 0), (0, n_pad - n)))

    w_flat = weight.reshape(3).astype(jnp.float32)   # scalars for SMEM
    b_flat = bias.reshape(1).astype(jnp.float32)

    out_row = pl.pallas_call(
        _linear_kernel,
        out_shape=jax.ShapeDtypeStruct((1, n_pad), x.dtype),
        grid=(n_pad // tile,),
        in_specs=[
            pl.BlockSpec(memory_space=pltpu.MemorySpace.SMEM),   # weight (3,)
            pl.BlockSpec(memory_space=pltpu.MemorySpace.SMEM),   # bias (1,)
            pl.BlockSpec((3, tile), lambda i: (0, i)),           # x tile
        ],
        out_specs=pl.BlockSpec((1, tile), lambda i: (0, i)),
        compiler_params=pltpu.CompilerParams(
            dimension_semantics=("parallel",),                   # 2 TCs on v7x
        ),
    )(w_flat, b_flat, x_t)

    return out_row[0, :n].reshape(n, 1)


if __name__ == "__main__":
    # Deterministic parameter init matching the PyTorch module's __init__:
    # weight = full((1, 3), -0.5), bias = full((1, 1), -0.5)
    weight = jnp.full((1, 3), -0.5, dtype=jnp.float32)
    bias = jnp.full((1, 1), -0.5, dtype=jnp.float32)

    # Small deterministic input: batch=8, in_features=3.
    key = jax.random.PRNGKey(0)
    x = jax.random.normal(key, (8, 3), dtype=jnp.float32)

    out = my_regression_forward(x, weight, bias)
    out = jax.block_until_ready(out)

    # Sanity check against plain-JAX reference of the same linear op.
    ref = x @ weight.T + bias
    assert out.shape == (8, 1)
    assert jnp.allclose(out, ref, atol=1e-5, rtol=1e-5)

    print("KERNEL_OK")
</pallas_src>

<mosaic_0001>
module attributes {stable_mosaic.version = 11 : i64} {
  func.func @_linear_kernel(%arg0: i32, %arg1: memref<3xf32, #tpu.memory_space<smem>>, %arg2: memref<1xf32, #tpu.memory_space<smem>>, %arg3: memref<3x128xf32, #tpu.memory_space<vmem>>, %arg4: memref<1x128xf32, #tpu.memory_space<vmem>>) attributes {dimension_semantics = [#tpu.dimension_semantics<parallel>], iteration_bounds = array<i64: 1>, scalar_prefetch = 0 : i64, scratch_operands = 0 : i64, tpu.core_type = #tpu.core_type<tc>, window_params = [{transform_indices = @transform_0, window_bounds = array<i64: 3>}, {transform_indices = @transform_1, window_bounds = array<i64: 1>}, {transform_indices = @transform_2, window_bounds = array<i64: 3, 128>}, {transform_indices = @transform_3, window_bounds = array<i64: 1, 128>}]} {
    %c0 = arith.constant 0 : index
    %c0_0 = arith.constant 0 : index
    %0 = vector.load %arg3[%c0, %c0_0] : memref<3x128xf32, #tpu.memory_space<vmem>>, vector<1x128xf32>
    %c1 = arith.constant 1 : index
    %c0_1 = arith.constant 0 : index
    %1 = vector.load %arg3[%c1, %c0_1] : memref<3x128xf32, #tpu.memory_space<vmem>>, vector<1x128xf32>
    %c2 = arith.constant 2 : index
    %c0_2 = arith.constant 0 : index
    %2 = vector.load %arg3[%c2, %c0_2] : memref<3x128xf32, #tpu.memory_space<vmem>>, vector<1x128xf32>
    %c0_3 = arith.constant 0 : index
    %3 = memref.load %arg1[%c0_3] : memref<3xf32, #tpu.memory_space<smem>>
    %4 = vector.broadcast %3 : f32 to vector<1x128xf32>
    %5 = arith.mulf %4, %0 : vector<1x128xf32>
    %c1_4 = arith.constant 1 : index
    %6 = memref.load %arg1[%c1_4] : memref<3xf32, #tpu.memory_space<smem>>
    %7 = vector.broadcast %6 : f32 to vector<1x128xf32>
    %8 = arith.mulf %7, %1 : vector<1x128xf32>
    %9 = arith.addf %5, %8 : vector<1x128xf32>
    %c2_5 = arith.constant 2 : index
    %10 = memref.load %arg1[%c2_5] : memref<3xf32, #tpu.memory_space<smem>>
    %11 = vector.broadcast %10 : f32 to vector<1x128xf32>
    %12 = arith.mulf %11, %2 : vector<1x128xf32>
    %13 = arith.addf %9, %12 : vector<1x128xf32>
    %c0_6 = arith.constant 0 : index
    %14 = memref.load %arg2[%c0_6] : memref<1xf32, #tpu.memory_space<smem>>
    %15 = vector.broadcast %14 : f32 to vector<1x128xf32>
    %16 = arith.addf %13, %15 : vector<1x128xf32>
    %c0_7 = arith.constant 0 : index
    %c0_8 = arith.constant 0 : index
    %17 = vector.load %arg4[%c0_7, %c0_8] : memref<1x128xf32, #tpu.memory_space<vmem>>, vector<1x128xf32>
    tpu.vector_store %arg4[%c0_7, %c0_8], %16 {strides = array<i32>} : memref<1x128xf32, #tpu.memory_space<vmem>>, vector<1x128xf32>,
    return
  }
  func.func @transform_0(%arg0: i32) -> i32 {
    %c0_i32 = arith.constant 0 : i32
    %c0_i32_0 = arith.constant 0 : i32
    return %c0_i32 : i32
  }
  func.func @transform_1(%arg0: i32) -> i32 {
    %c0_i32 = arith.constant 0 : i32
    %c0_i32_0 = arith.constant 0 : i32
    return %c0_i32 : i32
  }
  func.func @transform_2(%arg0: i32) -> (i32, i32) {
    %c0_i32 = arith.constant 0 : i32
    %c0_i32_0 = arith.constant 0 : i32
    return %c0_i32, %arg0 : i32, i32
  }
  func.func @transform_3(%arg0: i32) -> (i32, i32) {
    %c0_i32 = arith.constant 0 : i32
    %c0_i32_0 = arith.constant 0 : i32
    return %c0_i32, %arg0 : i32, i32
  }
}

</mosaic_0001>

<llo_original>
// kernel: tpu_custom_call.1
$region0: #{tpu_custom_call.1}
  #allocation0 [shape = 'u32[]', space=smem, size = 0x4, offset = 0x4, fixed_abs, tag = 'smem constant byte address 0x4 - core index']
  #allocation1 [shape = 'u32[144,128]{1,0:T(1,128)}', space=vmem, size = 0x12000, scoped, tag = 'internal scratch']
  #allocation2 [shape = 'f32[1]{0:T(128)S(6)}', space=smem, size = 0x200, scoped, tag = 'scoped memory for tpu_custom_call.1']
  %s0 = inlined_call_operand.vmem [shape: f32[3], index: 0, kind: input, shape index: {}]
  %s1 = inlined_call_operand.<no memory space> [shape: f32[1], index: 1, kind: input, shape index: {}]
  %s2 = inlined_call_operand.hbm [shape: f32[3,128], index: 2, kind: input, shape index: {}]
  %s3 = inlined_call_operand.hbm [shape: f32[1,128], index: 3, kind: output, shape index: {}]
  %s4 = sld [smem:[#allocation0]]
  $region30: #{tpu_custom_call.1} parent=0
    _
  %s6 = ssub.s32 1, %s4
  %s7 = scalar_select 0, %s6, %s4
  %8 = sst [smem:[#allocation2]] %s1
  $region1: #{tpu_custom_call.1} parent=0
    #allocation3 [shape = 'u8[512]{0}', space=smem, size = 0x200, scoped, tag = 'input window, operand 0, single buffered']
    #allocation4 [shape = 's32[1]{0}', space=sflag, size = 0x4, scoped, tag = 'scoped memory for tpu_custom_call.1']
    #allocation5 [shape = 's32[1]{0}', space=sflag, size = 0x4, scoped, tag = 'scoped memory for tpu_custom_call.1']
    #allocation6 [shape = 's32[1]{0}', space=sflag, size = 0x4, scoped, tag = 'scoped memory for tpu_custom_call.1']
    #allocation7 [shape = 'u8[2048]{0}', space=vmem, size = 0x800, scoped, tag = 'input window, operand 2, single buffered']
    #allocation8 [shape = 'u8[512]{0}', space=vmem, size = 0x400, scoped, tag = 'output window, operand 0, single buffered']
    %9 = vsyncpa [#allocation6], 0
    %10 = vsyncpa [#allocation4], 0
    %11 = vsyncpa [#allocation5], 0
    // Predicated region
    $region2: #{tpu_custom_call.1} parent=1 // pred_check
      _
    $region3: #{tpu_custom_call.1} parent=1 // pred_check_branch
      %13 = sbr.rel (0) target = $region5
    $region4: #{tpu_custom_call.1} parent=1 // pred_region
      %s15 = ssub.s32 16, 16
      %16 = vsyncadd [#allocation6], %s15
      %s18 = sshll.u32 %s0, 4
      %s19 = int_to_ptr.vmem [resolvable:$true] %s18
      %21 = dma.vmem_to_smem %s19, 16, [#allocation3], [#allocation6]
    $region5: #{tpu_custom_call.1} parent=1 // pred_fallthru
      _
    // Predicated region
    $region6: #{tpu_custom_call.1} parent=1 // pred_check
      _
    $region7: #{tpu_custom_call.1} parent=1 // pred_check_branch
      %23 = sbr.rel (0) target = $region9
    $region8: #{tpu_custom_call.1} parent=1 // pred_region
      _
    $region9: #{tpu_custom_call.1} parent=1 // pred_fallthru
      _
    // Predicated region
    $region10: #{tpu_custom_call.1} parent=1 // pred_check
      _
    $region11: #{tpu_custom_call.1} parent=1 // pred_check_branch
      %25 = sbr.rel (0) target = $region13
    $region12: #{tpu_custom_call.1} parent=1 // pred_region
      %s27 = ssub.s32 64, 64
      %28 = vsyncadd [#allocation4], %s27
      %s30 = sshll.u32 [#allocation7], 4
      %s31 = int_to_ptr.vmem [resolvable:$true] %s30
      %33 = dma.hbm_to_vmem [thread:$0]  %s2, 64, %s31, [#allocation4]
    $region13: #{tpu_custom_call.1} parent=1 // pred_fallthru
      _
    // Predicated region
    $region14: #{tpu_custom_call.1} parent=1 // pred_check
      _
    $region15: #{tpu_custom_call.1} parent=1 // pred_check_branch
      %35 = sbr.rel (0) target = $region17
    $region16: #{tpu_custom_call.1} parent=1 // pred_region
      %36 = dma.done [#allocation6], 16
    $region17: #{tpu_custom_call.1} parent=1 // pred_fallthru
      _
    // Predicated region
    $region18: #{tpu_custom_call.1} parent=1 // pred_check
      _
    $region19: #{tpu_custom_call.1} parent=1 // pred_check_branch
      %38 = sbr.rel (0) target = $region21
    $region20: #{tpu_custom_call.1} parent=1 // pred_region
      %39 = dma.done [#allocation4], 64
    $region21: #{tpu_custom_call.1} parent=1 // pred_fallthru
      _
    %40 = sfence
    %v41 = vld [vmem:[#allocation7] sm:$0x1]
    %v42 = vld [vmem:[#allocation7 + $0x1] sm:$0x1]
    %v43 = vld [vmem:[#allocation7 + $0x2] sm:$0x1]
    %s44 = sld [smem:[#allocation3]]
    %v45 = vstv %s44
    %v46 = vmul.f32 %v45, %v41
    %s47 = sld [smem:[#allocation3 + $0x1]]
    %v48 = vstv %s47
    %v49 = vmul.f32 %v48, %v42
    %v50 = vadd.f32 %v46, %v49
    %s51 = sld [smem:[#allocation3 + $0x2]]
    %v52 = vstv %s51
    %v53 = vmul.f32 %v52, %v43
    %v54 = vadd.f32 %v50, %v53
    %s55 = sld [smem:[#allocation2]]
    %v56 = vstv %s55
    %v57 = vadd.f32 %v54, %v56
    %58 = vst [vmem:[#allocation8] sm:$0x1] %v57
    // Predicated region
    $region22: #{tpu_custom_call.1} parent=1 // pred_check
      _
    $region23: #{tpu_custom_call.1} parent=1 // pred_check_branch
      %60 = sbr.rel (0) target = $region25
    $region24: #{tpu_custom_call.1} parent=1 // pred_region
      %s62 = ssub.s32 16, 16
      %63 = vsyncadd [#allocation5], %s62
      %s65 = sshll.u32 [#allocation8], 4
      %s66 = int_to_ptr.vmem [resolvable:$true] %s65
      %68 = dma.vmem_to_hbm [thread:$0]  %s66, 16, %s3, [#allocation5]
    $region25: #{tpu_custom_call.1} parent=1 // pred_fallthru
      _
    // Predicated region
    $region26: #{tpu_custom_call.1} parent=1 // pred_check
      _
    $region27: #{tpu_custom_call.1} parent=1 // pred_check_branch
      %70 = sbr.rel (0) target = $region29
    $region28: #{tpu_custom_call.1} parent=1 // pred_region
      %71 = dma.done [#allocation5], 16
    $region29: #{tpu_custom_call.1} parent=1 // pred_fallthru
      _
    %72 = vsyncpa [#allocation4], 1
    %73 = vsyncpa [#allocation5], 1
    %74 = vsyncpa [#allocation6], 1

</llo_original>
